<compile_context>
chip_gen: v7x
topology: tpu7x:2x2x1
jax: 0.10.0
libtpu: 0.0.40
codegen_flags: <defaults>
</compile_context>

<pallas_src>
from functools import partial

import jax
import jax.numpy as jnp
from jax import lax
from jax.experimental import pallas as pl
from jax.experimental.pallas import tpu as pltpu


def _temporal_downsample_kernel(x_ref, w_ref, b_ref, o_ref, *,
                                t_in, t_out, stride, fold, unroll_interior):
    # x_ref : (1, C, T, TS)
    # w_ref : (C, 3*C) if fold  (w2[o, k*C + c] = weight[o, c, k])
    #         (3, C, C) otherwise (wt[k, o, c] = weight[o, c, k])
    # b_ref : (C, 1)
    # o_ref : (1, C, t_out, TS)
    C = o_ref.shape[1]
    TS = o_ref.shape[3]
    x_dtype = x_ref.dtype

    w = w_ref[...]
    # Hoisted bias broadcast (broadcast_in_dim is not CSE'd by JAX).
    bias = jnp.broadcast_to(b_ref[...].astype(jnp.float32), (C, TS))

    def tap_slice(j):
        # j: static python int (boundary frames; may be out of range -> zero pad)
        # or a traced scalar (interior frames; always in range).
        if isinstance(j, int) and not (0 <= j < t_in):
            return jnp.zeros((C, TS), x_dtype)
        return x_ref[0, :, j, :]

    def frame(j0):
        # One output frame for taps (j0, j0+1, j0+2), f32 accumulation.
        if fold:
            xf = jnp.concatenate(
                [tap_slice(j0), tap_slice(j0 + 1), tap_slice(j0 + 2)], axis=0)  # (3C, TS)
            return jnp.dot(w, xf, preferred_element_type=jnp.float32)           # (C, TS)
        acc = None
        for k in range(3):
            j = j0 + k
            if isinstance(j, int) and not (0 <= j < t_in):
                continue                                    # elide zero-pad taps
            term = jnp.dot(w[k], tap_slice(j), preferred_element_type=jnp.float32)
            acc = term if acc is None else acc + term
        return acc

    def store_frame(to, val):
        # Direct per-frame store (lane-dense; TS is a multiple of 128).
        o_ref[0, :, to, :] = (val + bias).astype(o_ref.dtype)

    # First output frame: tap j = -1 is zero padding (elided / zero-filled).
    store_frame(0, frame(-1))

    # Interior frames: all three taps in range.
    last_interior = t_out - 1 if (t_in % 2 == 0) else t_out - 2
    n_interior = max(0, last_interior)          # frames 1 .. last_interior
    if n_interior > 0:
        if n_interior <= unroll_interior:
            for to in range(1, last_interior + 1):
                store_frame(to, frame(stride * to - 1))
        else:
            def body(to, carry):
                store_frame(to, frame(stride * to - 1))
                return carry
            lax.fori_loop(1, last_interior + 1, body, 0)

    # Last output frame when T is odd: tap j = T is zero padding.
    if t_in % 2 == 1:
        to = t_out - 1
        store_frame(to, frame(stride * to - 1))


def _pick_spatial_tile(S, C, T, itemsize, target_bytes=6 << 20):
    """Largest multiple-of-128 divisor of S keeping the input block <= ~target_bytes."""
    assert S % 128 == 0
    per_lane = max(C * T * itemsize, 1)
    max_lanes = max(128, (target_bytes // per_lane) // 128 * 128)
    for cand in range(min(S, max_lanes), 127, -128):
        if S % cand == 0:
            return cand
    return 128


def temporal_downsample(x, weight, bias):
    """x: (B, C, T, H, W) video; weight: (C, C, 3) Conv1d weight; bias: (C,)."""
    B, C, T, H, W = x.shape
    assert T > 1, "time dimension must be greater than 1 to be compressed"
    assert weight.shape == (C, C, 3) and bias.shape == (C,)
    # TODO(synk): only the 5-D video, channel_last=False path is implemented; the
    # '(b t) c h w' image path and channel_last=True are pure einops rearranges
    # around this same conv.

    S = H * W
    t_out = (T - 1) // 2 + 1
    x4 = x.reshape(B, C, T, S)                  # free row-major reshape

    # Pad the lane dim to a multiple of 128 once in HBM (only if ragged) rather
    # than taking masked partial stores on every frame of every tile.
    S_pad = ((S + 127) // 128) * 128
    if S_pad != S:
        x4 = jnp.pad(x4, ((0, 0), (0, 0), (0, 0), (0, S_pad - S)))

    fold = C < 256
    if fold:
        # Tap-major folded weights: w2[o, k*C + c] = weight[o, c, k]
        w_arg = jnp.transpose(weight, (0, 2, 1)).reshape(C, 3 * C)
        w_spec = pl.BlockSpec((C, 3 * C), lambda b, s: (0, 0))
    else:
        # Tap-major per-tap weights: wt[k, o, c] = weight[o, c, k]
        w_arg = jnp.transpose(weight, (2, 0, 1))
        w_spec = pl.BlockSpec((3, C, C), lambda b, s: (0, 0, 0))
    b2 = bias.reshape(C, 1)

    itemsize = x.dtype.itemsize
    s_tile = _pick_spatial_tile(S_pad, C, T, itemsize)
    if B * (S_pad // s_tile) < 2 and s_tile % 256 == 0:
        s_tile //= 2                            # keep both v7x TensorCores busy
    grid = (B, S_pad // s_tile)

    in_block = C * T * s_tile * itemsize
    out_block = C * t_out * s_tile * itemsize
    w_bytes = int(w_arg.size) * w_arg.dtype.itemsize
    vmem_needed = 2 * (in_block + out_block) + 2 * w_bytes + (2 << 20)
    try:
        hw_vmem = int(pltpu.get_tpu_info().vmem_capacity_bytes)
    except Exception:
        hw_vmem = 64 << 20                      # conservative (v7x per-TensorCore)
    vmem_limit = int(min(max(hw_vmem - (8 << 20), 32 << 20),
                         max(32 << 20, vmem_needed)))
    # TODO(synk): for very large C (>= ~1024) add a c_out grid axis with a
    # (3, c_tile, C) weight block so resident weights stop squeezing v7x VMEM.

    kernel = partial(_temporal_downsample_kernel, t_in=T, t_out=t_out, stride=2,
                     fold=fold, unroll_interior=8)
    out = pl.pallas_call(
        kernel,
        out_shape=jax.ShapeDtypeStruct((B, C, t_out, S_pad), x.dtype),
        grid_spec=pltpu.PrefetchScalarGridSpec(
            num_scalar_prefetch=0,
            grid=grid,
            in_specs=[
                # one (batch, spatial-tile) block per grid step; lanes = s_tile
                pl.BlockSpec((1, C, T, s_tile), lambda b, s: (b, 0, 0, s)),
                w_spec,                                    # resident weights
                pl.BlockSpec((C, 1), lambda b, s: (0, 0)),  # resident bias
            ],
            out_specs=pl.BlockSpec((1, C, t_out, s_tile),
                                   lambda b, s: (b, 0, 0, s)),
        ),
        compiler_params=pltpu.CompilerParams(
            dimension_semantics=("parallel", "parallel"),
            vmem_limit_bytes=vmem_limit),
    )(x4, w_arg, b2)

    if S_pad != S:
        out = out[..., :S]
    return out.reshape(B, C, t_out, H, W)


def _reference(x, weight, bias):
    # pure-JAX reference of the PyTorch forward (Conv1d k=3, stride=2, pad=1 over T)
    B, C, T, H, W = x.shape
    t_out = (T - 1) // 2 + 1
    xpad = jnp.pad(x, ((0, 0), (0, 0), (1, 1), (0, 0), (0, 0)))
    cols = []
    for to in range(t_out):
        patch = xpad[:, :, 2 * to:2 * to + 3]                     # (B, C, 3, H, W)
        val = jnp.einsum('bckhw,ock->bohw', patch, weight,
                         precision=lax.Precision.HIGHEST)
        cols.append(val + bias.reshape(1, C, 1, 1))
    return jnp.stack(cols, axis=2)                                 # (B, C, T_out, H, W)


if __name__ == "__main__":
    key = jax.random.PRNGKey(0)
    B, C, T, H, W = 2, 4, 8, 16, 16
    x = jax.random.normal(key, (B, C, T, H, W), dtype=jnp.float32)

    # Parameters matching the module's __init__ (init_bilinear_kernel_1d_):
    # zero weight & bias, then each channel's diagonal gets [0.5, 1.0, 0.5].
    bilinear = jnp.array([0.5, 1.0, 0.5], dtype=jnp.float32)
    diag = jnp.arange(C)
    weight = jnp.zeros((C, C, 3), dtype=jnp.float32).at[diag, diag, :].set(bilinear)
    bias = jnp.zeros((C,), dtype=jnp.float32)

    out = jax.block_until_ready(temporal_downsample(x, weight, bias))
    ref = _reference(x, weight, bias)

    t_out = (T - 1) // 2 + 1
    assert out.shape == (B, C, t_out, H, W)
    # Default (single-pass) MXU precision is used in the kernel, so tolerance is
    # loosened relative to the f32 HIGHEST-precision reference.
    assert jnp.allclose(out, ref, atol=5e-2, rtol=5e-2), \
        float(jnp.max(jnp.abs(out - ref)))

    print("KERNEL_OK")
</pallas_src>

<mosaic_0001>
module attributes {stable_mosaic.version = 11 : i64} {
  func.func @_temporal_downsample_kernel(%arg0: i32, %arg1: i32, %arg2: memref<1x4x8x256xf32, #tpu.memory_space<vmem>>, %arg3: memref<4x12xf32, #tpu.memory_space<vmem>>, %arg4: memref<4x1xf32, #tpu.memory_space<vmem>>, %arg5: memref<1x4x4x256xf32, #tpu.memory_space<vmem>>) attributes {dimension_semantics = [#tpu.dimension_semantics<parallel>, #tpu.dimension_semantics<parallel>], iteration_bounds = array<i64: 2, 1>, scalar_prefetch = 0 : i64, scratch_operands = 0 : i64, tpu.core_type = #tpu.core_type<tc>, window_params = [{transform_indices = @transform_0, window_bounds = array<i64: 1, 4, 8, 256>}, {pipeline_mode = #tpu.pipeline_mode<synchronous>, transform_indices = @transform_1, window_bounds = array<i64: 4, 12>}, {pipeline_mode = #tpu.pipeline_mode<synchronous>, transform_indices = @transform_2, window_bounds = array<i64: 4, 1>}, {transform_indices = @transform_3, window_bounds = array<i64: 1, 4, 4, 256>}]} {
    %c0 = arith.constant 0 : index
    %c0_0 = arith.constant 0 : index
    %0 = vector.load %arg3[%c0, %c0_0] : memref<4x12xf32, #tpu.memory_space<vmem>>, vector<4x12xf32>
    %c0_1 = arith.constant 0 : index
    %c0_2 = arith.constant 0 : index
    %1 = vector.load %arg4[%c0_1, %c0_2] : memref<4x1xf32, #tpu.memory_space<vmem>>, vector<4x1xf32>
    %2 = vector.shape_cast %1 : vector<4x1xf32> to vector<4x1xf32>
    %3 = vector.broadcast %2 : vector<4x1xf32> to vector<4x256xf32>
    %cst = arith.constant 0.000000e+00 : f32
    %4 = vector.broadcast %cst : f32 to vector<4x256xf32>
    %c0_3 = arith.constant 0 : index
    %c0_4 = arith.constant 0 : index
    %c0_5 = arith.constant 0 : index
    %c0_6 = arith.constant 0 : index
    %5 = vector.load %arg2[%c0_3, %c0_4, %c0_5, %c0_6] : memref<1x4x8x256xf32, #tpu.memory_space<vmem>>, vector<1x4x1x256xf32>
    %6 = vector.shape_cast %5 : vector<1x4x1x256xf32> to vector<4x256xf32>
    %c0_7 = arith.constant 0 : index
    %c0_8 = arith.constant 0 : index
    %c1 = arith.constant 1 : index
    %c0_9 = arith.constant 0 : index
    %7 = vector.load %arg2[%c0_7, %c0_8, %c1, %c0_9] : memref<1x4x8x256xf32, #tpu.memory_space<vmem>>, vector<1x4x1x256xf32>
    %8 = vector.shape_cast %7 : vector<1x4x1x256xf32> to vector<4x256xf32>
    %9 = tpu.concatenate %4, %6, %8 in 0 : vector<4x256xf32>, vector<4x256xf32>, vector<4x256xf32> -> vector<12x256xf32>
    %cst_10 = arith.constant dense<0.000000e+00> : vector<4x256xf32>
    %10 = tpu.matmul %0, %9, %cst_10 {dimension_numbers = #tpu.dot_dimension_numbers<[1], [0], [0], [1], [0, 0, 1, 1], [], []>} : vector<4x12xf32>, vector<12x256xf32>, vector<4x256xf32> -> vector<4x256xf32>
    %11 = arith.addf %10, %3 : vector<4x256xf32>
    %c0_11 = arith.constant 0 : index
    %c0_12 = arith.constant 0 : index
    %c0_13 = arith.constant 0 : index
    %c0_14 = arith.constant 0 : index
    %12 = vector.load %arg5[%c0_11, %c0_12, %c0_13, %c0_14] : memref<1x4x4x256xf32, #tpu.memory_space<vmem>>, vector<1x4x1x256xf32>
    %13 = vector.shape_cast %12 : vector<1x4x1x256xf32> to vector<4x256xf32>
    %14 = vector.shape_cast %11 : vector<4x256xf32> to vector<1x4x1x256xf32>
    tpu.vector_store %arg5[%c0_11, %c0_12, %c0_13, %c0_14], %14 {strides = array<i32>} : memref<1x4x4x256xf32, #tpu.memory_space<vmem>>, vector<1x4x1x256xf32>,
    %c0_15 = arith.constant 0 : index
    %c0_16 = arith.constant 0 : index
    %c1_17 = arith.constant 1 : index
    %c0_18 = arith.constant 0 : index
    %15 = vector.load %arg2[%c0_15, %c0_16, %c1_17, %c0_18] : memref<1x4x8x256xf32, #tpu.memory_space<vmem>>, vector<1x4x1x256xf32>
    %16 = vector.shape_cast %15 : vector<1x4x1x256xf32> to vector<4x256xf32>
    %c0_19 = arith.constant 0 : index
    %c0_20 = arith.constant 0 : index
    %c2 = arith.constant 2 : index
    %c0_21 = arith.constant 0 : index
    %17 = vector.load %arg2[%c0_19, %c0_20, %c2, %c0_21] : memref<1x4x8x256xf32, #tpu.memory_space<vmem>>, vector<1x4x1x256xf32>
    %18 = vector.shape_cast %17 : vector<1x4x1x256xf32> to vector<4x256xf32>
    %c0_22 = arith.constant 0 : index
    %c0_23 = arith.constant 0 : index
    %c3 = arith.constant 3 : index
    %c0_24 = arith.constant 0 : index
    %19 = vector.load %arg2[%c0_22, %c0_23, %c3, %c0_24] : memref<1x4x8x256xf32, #tpu.memory_space<vmem>>, vector<1x4x1x256xf32>
    %20 = vector.shape_cast %19 : vector<1x4x1x256xf32> to vector<4x256xf32>
    %21 = tpu.concatenate %16, %18, %20 in 0 : vector<4x256xf32>, vector<4x256xf32>, vector<4x256xf32> -> vector<12x256xf32>
    %cst_25 = arith.constant dense<0.000000e+00> : vector<4x256xf32>
    %22 = tpu.matmul %0, %21, %cst_25 {dimension_numbers = #tpu.dot_dimension_numbers<[1], [0], [0], [1], [0, 0, 1, 1], [], []>} : vector<4x12xf32>, vector<12x256xf32>, vector<4x256xf32> -> vector<4x256xf32>
    %23 = arith.addf %22, %3 : vector<4x256xf32>
    %c0_26 = arith.constant 0 : index
    %c0_27 = arith.constant 0 : index
    %c1_28 = arith.constant 1 : index
    %c0_29 = arith.constant 0 : index
    %24 = vector.load %arg5[%c0_26, %c0_27, %c1_28, %c0_29] : memref<1x4x4x256xf32, #tpu.memory_space<vmem>>, vector<1x4x1x256xf32>
    %25 = vector.shape_cast %24 : vector<1x4x1x256xf32> to vector<4x256xf32>
    %26 = vector.shape_cast %23 : vector<4x256xf32> to vector<1x4x1x256xf32>
    tpu.vector_store %arg5[%c0_26, %c0_27, %c1_28, %c0_29], %26 {strides = array<i32>} : memref<1x4x4x256xf32, #tpu.memory_space<vmem>>, vector<1x4x1x256xf32>,
    %c0_30 = arith.constant 0 : index
    %c0_31 = arith.constant 0 : index
    %c3_32 = arith.constant 3 : index
    %c0_33 = arith.constant 0 : index
    %27 = vector.load %arg2[%c0_30, %c0_31, %c3_32, %c0_33] : memref<1x4x8x256xf32, #tpu.memory_space<vmem>>, vector<1x4x1x256xf32>
    %28 = vector.shape_cast %27 : vector<1x4x1x256xf32> to vector<4x256xf32>
    %c0_34 = arith.constant 0 : index
    %c0_35 = arith.constant 0 : index
    %c4 = arith.constant 4 : index
    %c0_36 = arith.constant 0 : index
    %29 = vector.load %arg2[%c0_34, %c0_35, %c4, %c0_36] : memref<1x4x8x256xf32, #tpu.memory_space<vmem>>, vector<1x4x1x256xf32>
    %30 = vector.shape_cast %29 : vector<1x4x1x256xf32> to vector<4x256xf32>
    %c0_37 = arith.constant 0 : index
    %c0_38 = arith.constant 0 : index
    %c5 = arith.constant 5 : index
    %c0_39 = arith.constant 0 : index
    %31 = vector.load %arg2[%c0_37, %c0_38, %c5, %c0_39] : memref<1x4x8x256xf32, #tpu.memory_space<vmem>>, vector<1x4x1x256xf32>
    %32 = vector.shape_cast %31 : vector<1x4x1x256xf32> to vector<4x256xf32>
    %33 = tpu.concatenate %28, %30, %32 in 0 : vector<4x256xf32>, vector<4x256xf32>, vector<4x256xf32> -> vector<12x256xf32>
    %cst_40 = arith.constant dense<0.000000e+00> : vector<4x256xf32>
    %34 = tpu.matmul %0, %33, %cst_40 {dimension_numbers = #tpu.dot_dimension_numbers<[1], [0], [0], [1], [0, 0, 1, 1], [], []>} : vector<4x12xf32>, vector<12x256xf32>, vector<4x256xf32> -> vector<4x256xf32>
    %35 = arith.addf %34, %3 : vector<4x256xf32>
    %c0_41 = arith.constant 0 : index
    %c0_42 = arith.constant 0 : index
    %c2_43 = arith.constant 2 : index
    %c0_44 = arith.constant 0 : index
    %36 = vector.load %arg5[%c0_41, %c0_42, %c2_43, %c0_44] : memref<1x4x4x256xf32, #tpu.memory_space<vmem>>, vector<1x4x1x256xf32>
    %37 = vector.shape_cast %36 : vector<1x4x1x256xf32> to vector<4x256xf32>
    %38 = vector.shape_cast %35 : vector<4x256xf32> to vector<1x4x1x256xf32>
    tpu.vector_store %arg5[%c0_41, %c0_42, %c2_43, %c0_44], %38 {strides = array<i32>} : memref<1x4x4x256xf32, #tpu.memory_space<vmem>>, vector<1x4x1x256xf32>,
    %c0_45 = arith.constant 0 : index
    %c0_46 = arith.constant 0 : index
    %c5_47 = arith.constant 5 : index
    %c0_48 = arith.constant 0 : index
    %39 = vector.load %arg2[%c0_45, %c0_46, %c5_47, %c0_48] : memref<1x4x8x256xf32, #tpu.memory_space<vmem>>, vector<1x4x1x256xf32>
    %40 = vector.shape_cast %39 : vector<1x4x1x256xf32> to vector<4x256xf32>
    %c0_49 = arith.constant 0 : index
    %c0_50 = arith.constant 0 : index
    %c6 = arith.constant 6 : index
    %c0_51 = arith.constant 0 : index
    %41 = vector.load %arg2[%c0_49, %c0_50, %c6, %c0_51] : memref<1x4x8x256xf32, #tpu.memory_space<vmem>>, vector<1x4x1x256xf32>
    %42 = vector.shape_cast %41 : vector<1x4x1x256xf32> to vector<4x256xf32>
    %c0_52 = arith.constant 0 : index
    %c0_53 = arith.constant 0 : index
    %c7 = arith.constant 7 : index
    %c0_54 = arith.constant 0 : index
    %43 = vector.load %arg2[%c0_52, %c0_53, %c7, %c0_54] : memref<1x4x8x256xf32, #tpu.memory_space<vmem>>, vector<1x4x1x256xf32>
    %44 = vector.shape_cast %43 : vector<1x4x1x256xf32> to vector<4x256xf32>
    %45 = tpu.concatenate %40, %42, %44 in 0 : vector<4x256xf32>, vector<4x256xf32>, vector<4x256xf32> -> vector<12x256xf32>
    %cst_55 = arith.constant dense<0.000000e+00> : vector<4x256xf32>
    %46 = tpu.matmul %0, %45, %cst_55 {dimension_numbers = #tpu.dot_dimension_numbers<[1], [0], [0], [1], [0, 0, 1, 1], [], []>} : vector<4x12xf32>, vector<12x256xf32>, vector<4x256xf32> -> vector<4x256xf32>
    %47 = arith.addf %46, %3 : vector<4x256xf32>
    %c0_56 = arith.constant 0 : index
    %c0_57 = arith.constant 0 : index
    %c3_58 = arith.constant 3 : index
    %c0_59 = arith.constant 0 : index
    %48 = vector.load %arg5[%c0_56, %c0_57, %c3_58, %c0_59] : memref<1x4x4x256xf32, #tpu.memory_space<vmem>>, vector<1x4x1x256xf32>
    %49 = vector.shape_cast %48 : vector<1x4x1x256xf32> to vector<4x256xf32>
    %50 = vector.shape_cast %47 : vector<4x256xf32> to vector<1x4x1x256xf32>
    tpu.vector_store %arg5[%c0_56, %c0_57, %c3_58, %c0_59], %50 {strides = array<i32>} : memref<1x4x4x256xf32, #tpu.memory_space<vmem>>, vector<1x4x1x256xf32>,
    return
  }
  func.func @transform_0(%arg0: i32, %arg1: i32) -> (i32, i32, i32, i32) {
    %c0_i32 = arith.constant 0 : i32
    %c0_i32_0 = arith.constant 0 : i32
    %c0_i32_1 = arith.constant 0 : i32
    return %arg0, %c0_i32, %c0_i32_0, %arg1 : i32, i32, i32, i32
  }
  func.func @transform_1(%arg0: i32, %arg1: i32) -> (i32, i32) {
    %c0_i32 = arith.constant 0 : i32
    %c0_i32_0 = arith.constant 0 : i32
    %c0_i32_1 = arith.constant 0 : i32
    return %c0_i32, %c0_i32_0 : i32, i32
  }
  func.func @transform_2(%arg0: i32, %arg1: i32) -> (i32, i32) {
    %c0_i32 = arith.constant 0 : i32
    %c0_i32_0 = arith.constant 0 : i32
    %c0_i32_1 = arith.constant 0 : i32
    return %c0_i32, %c0_i32_0 : i32, i32
  }
  func.func @transform_3(%arg0: i32, %arg1: i32) -> (i32, i32, i32, i32) {
    %c0_i32 = arith.constant 0 : i32
    %c0_i32_0 = arith.constant 0 : i32
    %c0_i32_1 = arith.constant 0 : i32
    return %arg0, %c0_i32, %c0_i32_0, %arg1 : i32, i32, i32, i32
  }
}

</mosaic_0001>

<llo_original>
// kernel: tpu_custom_call.1
$region0: #{tpu_custom_call.1}
  #allocation0 [shape = 'u32[]', space=smem, size = 0x4, offset = 0x4, fixed_abs, tag = 'smem constant byte address 0x4 - core index']
  #allocation1 [shape = 'u32[144,128]{1,0:T(1,128)}', space=vmem, size = 0x12000, scoped, tag = 'internal scratch']
  %s0 = inlined_call_operand.hbm [shape: f32[2,4,8,256], index: 0, kind: input, shape index: {}]
  %s1 = inlined_call_operand.vmem [shape: f32[4,12], index: 1, kind: input, shape index: {}]
  %s2 = inlined_call_operand.vmem [shape: f32[4,1], index: 2, kind: input, shape index: {}]
  %s3 = inlined_call_operand.hbm [shape: f32[2,4,4,256], index: 3, kind: output, shape index: {}]
  %s4 = sld [smem:[#allocation0]]
  $region49: #{tpu_custom_call.1} parent=0
    _
  %s6 = ssub.s32 1, %s4
  %s7 = scalar_select 0, %s6, %s4
  $region1: #{tpu_custom_call.1} parent=0
    #allocation2 [shape = 'u8[65536]{0}', space=vmem, size = 0x10000, scoped, tag = 'input window, operand 0']
    #allocation3 [shape = 's32[2]{0}', space=sflag, size = 0x8, scoped, tag = 'scoped memory for tpu_custom_call.1']
    #allocation4 [shape = 's32[2]{0}', space=sflag, size = 0x8, scoped, tag = 'scoped memory for tpu_custom_call.1']
    #allocation5 [shape = 'u8[32768]{0}', space=vmem, size = 0x8000, scoped, tag = 'output window, operand 0']
    %8 = vsyncpa [#allocation3], 0
    %s9 = scalar_lea.sflag [#allocation3], 1
    %10 = vsyncpa %s9, 0
    %11 = vsyncpa [#allocation4], 0
    %s12 = scalar_lea.sflag [#allocation4], 1
    %13 = vsyncpa %s12, 0
    loop: start=0, step=1, limit=4
    $region2: #{tpu_custom_call.1} parent=1 // loop_pre_header
      _
    $region3: #{tpu_custom_call.1} parent=1 // loop_header
      %s15 = sphi 0, %s19
      %p16 = scmp.ge.s32.totalorder %s15, 4
      %s22 = sphi 0, %s34
      %s23 = sphi 0, %s30
      %s24 = sphi 0, %s22
      %s25 = sphi 0, %s23
      %s26 = sphi 0, %s24
      %s27 = sphi 0, %s25
      %s39 = sphi 0, %s41
      %s42 = sphi 0, %s39
      %s43 = sphi 0, %s42
      %s59 = sphi 0, %s43
      %s63 = sphi 0, %s63
      %s65 = sphi 0, %s63
      %s66 = sphi 0, %s65
      %s80 = sphi 0, %s66
      %s84 = sphi 0, %s84
      %s86 = sphi 0, %s84
      %s87 = sphi 0, %s86
      %s101 = sphi 0, %s87
      %s109 = sphi 0, %s111
      %s112 = sphi 0, %s109
      %s113 = sphi 0, %s112
      %s129 = sphi 0, %s113
    $region4: #{tpu_custom_call.1} parent=1 // loop_header_branch
      %18 = sbr.rel (%p16) target = $region8
    $region5: #{tpu_custom_call.1} parent=1 // loop_body
      %s20 = ssub.s32 %s15, 1
      %s21 = ssub.s32 %s15, 2
      %s28 = sadd.s32 1, %s23
      %p29 = scmp.ge.s32.totalorder %s28, 1
      %s30 = scalar_select %p29, 0, %s28
      %s31 = sadd.s32 1, %s22
      %s32 = scalar_select %p29, %s31, %s22
      %p33 = scmp.ge.s32.totalorder %s32, 2
      %s34 = scalar_select %p33, 0, %s32
      %s35 = ssub.s32 %s22, %s34
      %s36 = ssub.s32 %s23, %s30
      %s37 = sor.u32 %s35, %s36
      %p38 = scmp.eq.s32.totalorder %s37, 0
      %s40 = sadd.s32 %s39, 1
      %s41 = scalar_select %p38, %s39, %s40
      %p44 = pneg %p38
      %p45 = scmp.eq.s32.totalorder %s15, 1
      %p46 = por %p44, %p45
      %p47 = scmp.ne.s32.totalorder %s39, %s42
      %p48 = scmp.eq.s32.totalorder %s15, 0
      %p49 = por %p47, %p48
      %p50 = scmp.ne.s32.totalorder %s39, %s42
      %p51 = scmp.eq.s32.totalorder %s20, 1
      %p52 = por %p50, %p51
      %p53 = scmp.ne.s32.totalorder %s42, %s43
      %p54 = scmp.eq.s32.totalorder %s20, 0
      %p55 = por %p53, %p54
      %p56 = scmp.ne.s32.totalorder %s42, %s43
      %p57 = scmp.eq.s32.totalorder %s21, 1
      %p58 = por %p56, %p57
      %p60 = scmp.ne.s32.totalorder %s43, %s59
      %p61 = scmp.eq.s32.totalorder %s21, 0
      %p62 = por %p60, %p61
      %s64 = sadd.s32 %s63, 1
      %p67 = scmp.eq.s32.totalorder %s15, 1
      %p68 = scmp.ne.s32.totalorder %s63, %s65
      %p69 = scmp.eq.s32.totalorder %s15, 0
      %p70 = por %p68, %p69
      %p71 = scmp.ne.s32.totalorder %s63, %s65
      %p72 = scmp.eq.s32.totalorder %s20, 1
      %p73 = por %p71, %p72
      %p74 = scmp.ne.s32.totalorder %s65, %s66
      %p75 = scmp.eq.s32.totalorder %s20, 0
      %p76 = por %p74, %p75
      %p77 = scmp.ne.s32.totalorder %s65, %s66
      %p78 = scmp.eq.s32.totalorder %s21, 1
      %p79 = por %p77, %p78
      %p81 = scmp.ne.s32.totalorder %s66, %s80
      %p82 = scmp.eq.s32.totalorder %s21, 0
      %p83 = por %p81, %p82
      %s85 = sadd.s32 %s84, 1
      %p88 = scmp.eq.s32.totalorder %s15, 1
      %p89 = scmp.ne.s32.totalorder %s84, %s86
      %p90 = scmp.eq.s32.totalorder %s15, 0
      %p91 = por %p89, %p90
      %p92 = scmp.ne.s32.totalorder %s84, %s86
      %p93 = scmp.eq.s32.totalorder %s20, 1
      %p94 = por %p92, %p93
      %p95 = scmp.ne.s32.totalorder %s86, %s87
      %p96 = scmp.eq.s32.totalorder %s20, 0
      %p97 = por %p95, %p96
      %p98 = scmp.ne.s32.totalorder %s86, %s87
      %p99 = scmp.eq.s32.totalorder %s21, 1
      %p100 = por %p98, %p99
      %p102 = scmp.ne.s32.totalorder %s87, %s101
      %p103 = scmp.eq.s32.totalorder %s21, 0
      %p104 = por %p102, %p103
      %s105 = ssub.s32 %s22, %s34
      %s106 = ssub.s32 %s23, %s30
      %s107 = sor.u32 %s105, %s106
      %p108 = scmp.eq.s32.totalorder %s107, 0
      %s110 = sadd.s32 %s109, 1
      %s111 = scalar_select %p108, %s109, %s110
      %p114 = pneg %p108
      %p115 = scmp.eq.s32.totalorder %s15, 1
      %p116 = por %p114, %p115
      %p117 = scmp.ne.s32.totalorder %s109, %s112
      %p118 = scmp.eq.s32.totalorder %s15, 0
      %p119 = por %p117, %p118
      %p120 = scmp.ne.s32.totalorder %s109, %s112
      %p121 = scmp.eq.s32.totalorder %s20, 1
      %p122 = por %p120, %p121
      %p123 = scmp.ne.s32.totalorder %s112, %s113
      %p124 = scmp.eq.s32.totalorder %s20, 0
      %p125 = por %p123, %p124
      %p126 = scmp.ne.s32.totalorder %s112, %s113
      %p127 = scmp.eq.s32.totalorder %s21, 1
      %p128 = por %p126, %p127
      %p130 = scmp.ne.s32.totalorder %s113, %s129
      %p131 = scmp.eq.s32.totalorder %s21, 0
      %p132 = por %p130, %p131
      %p133 = scmp.le.s32.totalorder 1, %s15
      %p134 = scmp.lt.s32.totalorder %s15, 3
      %p135 = pnand %p133, %p134
      %p136 = pneg %p135
      // Predicated region
      $region9: #{tpu_custom_call.1} parent=5 // pred_check
        _
      $region10: #{tpu_custom_call.1} parent=5 // pred_check_branch
        %138 = sbr.rel (%p135) target = $region12
      $region11: #{tpu_custom_call.1} parent=5 // pred_region
        %s139 = ssub.s32 %s15, 1
        // Predicated region
        $region13: #{tpu_custom_call.1} parent=11 // pred_check
          %p140 = pneg %p76
        $region14: #{tpu_custom_call.1} parent=11 // pred_check_branch
          %142 = sbr.rel (%p140) target = $region16
        $region15: #{tpu_custom_call.1} parent=11 // pred_region
          _
        $region16: #{tpu_custom_call.1} parent=11 // pred_fallthru
          _
        // Predicated region
        $region17: #{tpu_custom_call.1} parent=11 // pred_check
          %p143 = pneg %p97
        $region18: #{tpu_custom_call.1} parent=11 // pred_check_branch
          %145 = sbr.rel (%p143) target = $region20
        $region19: #{tpu_custom_call.1} parent=11 // pred_region
          _
        $region20: #{tpu_custom_call.1} parent=11 // pred_fallthru
          _
      $region12: #{tpu_custom_call.1} parent=5 // pred_fallthru
        _
      %p146 = scmp.lt.s32.totalorder %s15, 2
      // Predicated region
      $region21: #{tpu_custom_call.1} parent=5 // pred_check
        %p147 = pneg %p146
      $region22: #{tpu_custom_call.1} parent=5 // pred_check_branch
        %149 = sbr.rel (%p147) target = $region24
      $region23: #{tpu_custom_call.1} parent=5 // pred_region
        // Predicated region
        $region25: #{tpu_custom_call.1} parent=23 // pred_check
          %p150 = pneg %p49
        $region26: #{tpu_custom_call.1} parent=23 // pred_check_branch
          %152 = sbr.rel (%p150) target = $region28
        $region27: #{tpu_custom_call.1} parent=23 // pred_region
          %s153 = sand.u32 %s39, 1
          %s154 = scalar_lea.sflag [#allocation3], %s153
          %s155 = sand.u32 %s39, 1
          %s156 = smul.addr %s155, 64
          %s157 = scalar_lea.vmem [#allocation2], %s156
          %s158 = smul.u32 2, %s23
          %s160 = ssub.s32 1024, 1024
          %161 = vsyncadd %s154, %s160
          %s162 = smul.addr %s22, 8
          %s163 = sadd.s32 %s158, %s162
          %s164 = smul.addr %s163, 128
          %s165 = scalar_lea.hbm %s0, %s164
          %s166 = sshll.u32 %s157, 4
          %s167 = int_to_ptr.vmem [resolvable:$true] %s166
          %172 = dma.hbm_to_vmem [thread:$0]  %s165, 1024, %s167, %s154, 256, 256, 16
        $region28: #{tpu_custom_call.1} parent=23 // pred_fallthru
          _
      $region24: #{tpu_custom_call.1} parent=5 // pred_fallthru
        _
      %p173 = scmp.le.s32.totalorder 1, %s15
      %p174 = scmp.lt.s32.totalorder %s15, 3
      %p175 = pnand %p173, %p174
      %p176 = pneg %p175
      // Predicated region
      $region29: #{tpu_custom_call.1} parent=5 // pred_check
        _
      $region30: #{tpu_custom_call.1} parent=5 // pred_check_branch
        %178 = sbr.rel (%p175) target = $region32
      $region31: #{tpu_custom_call.1} parent=5 // pred_region
        %s179 = ssub.s32 %s15, 1
        %s180 = sand.u32 %s42, 1
        %s181 = scalar_lea.sflag [#allocation3], %s180
        %s182 = sand.u32 %s42, 1
        %s183 = smul.addr %s182, 64
        %s184 = scalar_lea.vmem [#allocation2], %s183
        // Predicated region
        $region33: #{tpu_custom_call.1} parent=31 // pred_check
          %p185 = pneg %p55
        $region34: #{tpu_custom_call.1} parent=31 // pred_check_branch
          %187 = sbr.rel (%p185) target = $region36
        $region35: #{tpu_custom_call.1} parent=31 // pred_region
          %188 = dma.done %s181, 1024
        $region36: #{tpu_custom_call.1} parent=31 // pred_fallthru
          _
        %s189 = sand.u32 %s42, 1
        %s190 = scalar_lea.sflag [#allocation3], %s189
        %s191 = sand.u32 %s42, 1
        %s192 = smul.addr %s191, 64
        %s193 = scalar_lea.vmem [#allocation2], %s192
        %p194 = pneg %p55
        %p195 = pneg %p52
        %p196 = pneg %p76
        %p197 = pneg %p73
        %p198 = pneg %p97
        %p199 = pneg %p94
        %p200 = pneg %p125
        %p201 = pneg %p122
        %s202 = sand.u32 %s112, 1
        %s203 = scalar_lea.sflag [#allocation4], %s202
        %s204 = sand.u32 %s112, 1
        %s205 = smul.addr %s204, 32
        %s206 = scalar_lea.vmem [#allocation5], %s205
        %s207 = smul.u32 2, %s25
        %s208 = smul.u32 2, %s25
        %v209 = vld [vmem:[%s1] sm:$0xf]
        %v210 = vld [vmem:[%s2] sm:$0xf]
        %212 = vset.pattern.permute.xlu0 0
        %213 = vperm.xlu0 %212, %v210
        %v214 = vpop.permute.xlu0 %213
        %v216 = vld [vmem:[%s184] ss:$8 sm:$0x3]
        %s217 = scalar_lea.vmem %s184, 16 [#allocation2]
        %v218 = vld [vmem:[%s217] ss:$8 sm:$0x3]
        %s219 = scalar_lea.vmem %s184, 32 [#allocation2]
        %v220 = vld [vmem:[%s219] ss:$8 sm:$0x3]
        %s221 = scalar_lea.vmem %s184, 48 [#allocation2]
        %v222 = vld [vmem:[%s221] ss:$8 sm:$0x3]
        %s223 = scalar_lea.vmem %s184, 1 [#allocation2]
        %v224 = vld [vmem:[%s223] ss:$8 sm:$0x3]
        %s225 = scalar_lea.vmem %s184, 17 [#allocation2]
        %v226 = vld [vmem:[%s225] ss:$8 sm:$0x3]
        %s227 = scalar_lea.vmem %s184, 33 [#allocation2]
        %v228 = vld [vmem:[%s227] ss:$8 sm:$0x3]
        %s229 = scalar_lea.vmem %s184, 49 [#allocation2]
        %v230 = vld [vmem:[%s229] ss:$8 sm:$0x3]
        %v235 = vcombine.low %v216, %v218
        %v236 = vcombine.low %v220, %v222
        %v238 = vunpack.c.l.s4 1966171168
        %v239 = vunpack.c.0.s8 %v238
        %v240 = vlaneseq
        %v241 = vshrl.u32 %v240, 7
        %v242 = vsub.s32 %v239, %v241
        %v243 = vrot.slane %v235, %v242
        %v245 = vunpack.c.l.s4 1966171168
        %v246 = vunpack.c.0.s8 %v245
        %v247 = vlaneseq
        %v248 = vshrl.u32 %v247, 7
        %v249 = vsub.s32 %v246, %v248
        %v250 = vrot.slane %v236, %v249
        %v251 = vcombine.low %v243, %v250
        %v252 = vcombine.high %v243, %v250
        %v254 = vunpack.c.l.s4 1966171168
        %v255 = vunpack.c.0.s8 %v254
        %v256 = vlaneseq
        %v257 = vshrl.u32 %v256, 7
        %v258 = vsub.s32 %v255, %v257
        %v259 = vrot.slane %v251, %v258
        %v261 = vunpack.c.l.s4 1966171168
        %v262 = vunpack.c.0.s8 %v261
        %v263 = vlaneseq
        %v264 = vshrl.u32 %v263, 7
        %v265 = vsub.s32 %v262, %v264
        %v266 = vrot.slane %v252, %v265
        %v267 = vcombine.low %v259, %v259
        %v268 = vcombine.low %v266, %v266
        %v275 = vcombine.low %v224, %v226
        %v276 = vcombine.low %v228, %v230
        %v278 = vunpack.c.l.s4 1966171168
        %v279 = vunpack.c.0.s8 %v278
        %v280 = vlaneseq
        %v281 = vshrl.u32 %v280, 7
        %v282 = vsub.s32 %v279, %v281
        %v283 = vrot.slane %v275, %v282
        %v285 = vunpack.c.l.s4 1966171168
        %v286 = vunpack.c.0.s8 %v285
        %v287 = vlaneseq
        %v288 = vshrl.u32 %v287, 7
        %v289 = vsub.s32 %v286, %v288
        %v290 = vrot.slane %v276, %v289
        %v291 = vcombine.low %v283, %v290
        %v292 = vcombine.high %v283, %v290
        %v294 = vunpack.c.l.s4 1966171168
        %v295 = vunpack.c.0.s8 %v294
        %v296 = vlaneseq
        %v297 = vshrl.u32 %v296, 7
        %v298 = vsub.s32 %v295, %v297
        %v299 = vrot.slane %v291, %v298
        %v301 = vunpack.c.l.s4 1966171168
        %v302 = vunpack.c.0.s8 %v301
        %v303 = vlaneseq
        %v304 = vshrl.u32 %v303, 7
        %v305 = vsub.s32 %v302, %v304
        %v306 = vrot.slane %v292, %v305
        %vm307 = vcmask 1043456
        %v308 = vsel %vm307, 0.0, %v267
        %v309 = vsel %vm307, 0.0, %v268
        %vm310 = vcmask 97280
        %v312 = vsel %vm310, %v209, 0
        %v314 = vsel %vm307, %v299, 0
        %v316 = vsel %vm307, %v306, 0
        %318 = vmatprep.subr.mxu0 %v309
        %319 = vmatpush1.msra.mxu0 %v308
        %320 = vmatprep.subr.mxu0 %v316
        %321 = vmatpush1.msra.mxu0 %v314
        %322 = vmatprep.subr.mxu0 0.0
        %323 = vmatpush1.msra.mxu0 0.0
        %324 = vmatprep.subr.mxu0 0.0
        %325 = vmatpush1.msra.mxu0 0.0
        %326 = vmatprep.subr.mxu0 0.0
        %327 = vmatpush1.msra.mxu0 0.0
        %328 = vmatprep.subr.mxu0 0.0
        %329 = vmatpush1.msra.mxu0 0.0
        %330 = vmatprep.subr.mxu0 0.0
        %331 = vmatpush1.msra.mxu0 0.0
        %332 = vmatprep.subr.mxu0 0.0
        %333 = vmatpush1.msra.mxu0 0.0
        %334 = vmatprep.subr.mxu0 0.0
        %335 = vmatpush1.msra.mxu0 0.0
        %336 = vmatprep.subr.mxu0 0.0
        %337 = vmatpush1.msra.mxu0 0.0
        %338 = vmatprep.subr.mxu0 0.0
        %339 = vmatpush1.msra.mxu0 0.0
        %340 = vmatprep.subr.mxu0 0.0
        %341 = vmatpush1.msra.mxu0 0.0
        %342 = vmatprep.subr.mxu0 0.0
        %343 = vmatpush1.msra.mxu0 0.0
        %344 = vmatprep.subr.mxu0 0.0
        %345 = vmatpush1.msra.mxu0 0.0
        %346 = vmatprep.subr.mxu0 0.0
        %347 = vmatpush1.msra.mxu0 0.0
        %348 = vmatprep.subr.mxu0 0.0
        %349 = vmatpush1.msra.mxu0 0.0
        %350 = vmatprep.subr.mxu0 0.0
        %351 = vmatpush1.msra.mxu0 0.0
        %352 = vmatprep.subr.mxu0 0.0
        %353 = vmatpush1.msra.mxu0 0.0
        %354 = vmatprep.subr.mxu0 0.0
        %355 = vmatpush1.msra.mxu0 0.0
        %356 = vmatprep.subr.mxu0 0.0
        %357 = vmatpush1.msra.mxu0 0.0
        %358 = vmatprep.subr.mxu0 0.0
        %359 = vmatpush1.msra.mxu0 0.0
        %360 = vmatprep.subr.mxu0 0.0
        %361 = vmatpush1.msra.mxu0 0.0
        %362 = vmatprep.subr.mxu0 0.0
        %363 = vmatpush1.msra.mxu0 0.0
        %364 = vmatprep.subr.mxu0 0.0
        %365 = vmatpush1.msra.mxu0 0.0
        %366 = vmatprep.subr.mxu0 0.0
        %367 = vmatpush1.msra.mxu0 0.0
        %368 = vmatprep.subr.mxu0 0.0
        %369 = vmatpush1.msra.mxu0 0.0
        %370 = vmatprep.subr.mxu0 0.0
        %371 = vmatpush1.msra.mxu0 0.0
        %372 = vmatprep.subr.mxu0 0.0
        %373 = vmatpush1.msra.mxu0 0.0
        %374 = vmatprep.subr.mxu0 0.0
        %375 = vmatpush1.msra.mxu0 0.0
        %376 = vmatprep.subr.mxu0 0.0
        %377 = vmatpush1.msra.mxu0 0.0
        %378 = vmatprep.subr.mxu0 0.0
        %379 = vmatpush1.msra.mxu0 0.0
        %380 = vmatprep.subr.mxu0 0.0
        %381 = vmatpush1.msra.mxu0 0.0
        %382 = vmatprep.mubr.f32.mxu0 0.0
        %383 = vmatmul.mubr.f32.gmra.mrb[0].mxu0 %v312
        %v384 = vpop.f32.mrb[0].mxu0
        %v385 = vadd.f32 %v214, %v384
        %v386 = vpop.f32.mrb[0].mxu0
        %v387 = vadd.f32 %v214, %v386
        %388 = vdwg.mxu0
        %v391 = vcombine.low %v385, %v387
        %v393 = vunpack.c.l.s4 1966171168
        %v394 = vunpack.c.0.s8 %v393
        %v395 = vlaneseq
        %v396 = vshrl.u32 %v395, 7
        %v397 = vsub.s32 %v394, %v396
        %v398 = vrot.slane %v391, %v397
        %v399 = vcombine.high %v398, %v398
        %v401 = vunpack.c.l.s4 1966171168
        %v402 = vunpack.c.0.s8 %v401
        %v403 = vlaneseq
        %v404 = vshrl.u32 %v403, 7
        %v405 = vsub.s32 %v402, %v404
        %v406 = vrot.slane %v398, %v405
        %v408 = vunpack.c.l.s4 1966171168
        %v409 = vunpack.c.0.s8 %v408
        %v410 = vlaneseq
        %v411 = vshrl.u32 %v410, 7
        %v412 = vsub.s32 %v409, %v411
        %v413 = vrot.slane %v399, %v412
        %v414 = vcombine.high %v406, %v406
        %v415 = vcombine.high %v413, %v413
        %v420 = vlaneseq
        %vm421 = vcmp.ge.s32.totalorder %v420, 0
        %vm422 = vcmp.lt.s32.totalorder %v420, 256
        %vm423 = vmand %vm421, %vm422
        %424 = vst.msk [vmem:[%s206] ss:$4 sm:$0x3] %vm423, %v406
        %s425 = scalar_lea.vmem %s206, 8 [#allocation5]
        %426 = vst.msk [vmem:[%s425] ss:$4 sm:$0x3] %vm423, %v413
        %s427 = scalar_lea.vmem %s206, 16 [#allocation5]
        %428 = vst.msk [vmem:[%s427] ss:$4 sm:$0x3] %vm423, %v414
        %s429 = scalar_lea.vmem %s206, 24 [#allocation5]
        %430 = vst.msk [vmem:[%s429] ss:$4 sm:$0x3] %vm423, %v415
        %v431 = vld [vmem:[%s223] ss:$8 sm:$0x3]
        %v432 = vld [vmem:[%s225] ss:$8 sm:$0x3]
        %v433 = vld [vmem:[%s227] ss:$8 sm:$0x3]
        %v434 = vld [vmem:[%s229] ss:$8 sm:$0x3]
        %s435 = scalar_lea.vmem %s184, 2 [#allocation2]
        %v436 = vld [vmem:[%s435] ss:$8 sm:$0x3]
        %s437 = scalar_lea.vmem %s184, 18 [#allocation2]
        %v438 = vld [vmem:[%s437] ss:$8 sm:$0x3]
        %s439 = scalar_lea.vmem %s184, 34 [#allocation2]
        %v440 = vld [vmem:[%s439] ss:$8 sm:$0x3]
        %s441 = scalar_lea.vmem %s184, 50 [#allocation2]
        %v442 = vld [vmem:[%s441] ss:$8 sm:$0x3]
        %s443 = scalar_lea.vmem %s184, 3 [#allocation2]
        %v444 = vld [vmem:[%s443] ss:$8 sm:$0x3]
        %s445 = scalar_lea.vmem %s184, 19 [#allocation2]
        %v446 = vld [vmem:[%s445] ss:$8 sm:$0x3]
        %s447 = scalar_lea.vmem %s184, 35 [#allocation2]
        %v448 = vld [vmem:[%s447] ss:$8 sm:$0x3]
        %s449 = scalar_lea.vmem %s184, 51 [#allocation2]
        %v450 = vld [vmem:[%s449] ss:$8 sm:$0x3]
        %v455 = vcombine.low %v431, %v432
        %v456 = vcombine.low %v433, %v434
        %v458 = vunpack.c.l.s4 1966171168
        %v459 = vunpack.c.0.s8 %v458
        %v460 = vlaneseq
        %v461 = vshrl.u32 %v460, 7
        %v462 = vsub.s32 %v459, %v461
        %v463 = vrot.slane %v455, %v462
        %v465 = vunpack.c.l.s4 1966171168
        %v466 = vunpack.c.0.s8 %v465
        %v467 = vlaneseq
        %v468 = vshrl.u32 %v467, 7
        %v469 = vsub.s32 %v466, %v468
        %v470 = vrot.slane %v456, %v469
        %v471 = vcombine.low %v463, %v470
        %v472 = vcombine.high %v463, %v470
        %v474 = vunpack.c.l.s4 1966171168
        %v475 = vunpack.c.0.s8 %v474
        %v476 = vlaneseq
        %v477 = vshrl.u32 %v476, 7
        %v478 = vsub.s32 %v475, %v477
        %v479 = vrot.slane %v471, %v478
        %v481 = vunpack.c.l.s4 1966171168
        %v482 = vunpack.c.0.s8 %v481
        %v483 = vlaneseq
        %v484 = vshrl.u32 %v483, 7
        %v485 = vsub.s32 %v482, %v484
        %v486 = vrot.slane %v472, %v485
        %v493 = vcombine.low %v436, %v438
        %v494 = vcombine.low %v440, %v442
        %v496 = vunpack.c.l.s4 1966171168
        %v497 = vunpack.c.0.s8 %v496
        %v498 = vlaneseq
        %v499 = vshrl.u32 %v498, 7
        %v500 = vsub.s32 %v497, %v499
        %v501 = vrot.slane %v493, %v500
        %v503 = vunpack.c.l.s4 1966171168
        %v504 = vunpack.c.0.s8 %v503
        %v505 = vlaneseq
        %v506 = vshrl.u32 %v505, 7
        %v507 = vsub.s32 %v504, %v506
        %v508 = vrot.slane %v494, %v507
        %v509 = vcombine.low %v501, %v508
        %v510 = vcombine.high %v501, %v508
        %v512 = vunpack.c.l.s4 1966171168
        %v513 = vunpack.c.0.s8 %v512
        %v514 = vlaneseq
        %v515 = vshrl.u32 %v514, 7
        %v516 = vsub.s32 %v513, %v515
        %v517 = vrot.slane %v509, %v516
        %v519 = vunpack.c.l.s4 1966171168
        %v520 = vunpack.c.0.s8 %v519
        %v521 = vlaneseq
        %v522 = vshrl.u32 %v521, 7
        %v523 = vsub.s32 %v520, %v522
        %v524 = vrot.slane %v510, %v523
        %v525 = vcombine.low %v517, %v517
        %v526 = vcombine.low %v524, %v524
        %v533 = vcombine.low %v444, %v446
        %v534 = vcombine.low %v448, %v450
        %v536 = vunpack.c.l.s4 1966171168
        %v537 = vunpack.c.0.s8 %v536
        %v538 = vlaneseq
        %v539 = vshrl.u32 %v538, 7
        %v540 = vsub.s32 %v537, %v539
        %v541 = vrot.slane %v533, %v540
        %v543 = vunpack.c.l.s4 1966171168
        %v544 = vunpack.c.0.s8 %v543
        %v545 = vlaneseq
        %v546 = vshrl.u32 %v545, 7
        %v547 = vsub.s32 %v544, %v546
        %v548 = vrot.slane %v534, %v547
        %v549 = vcombine.low %v541, %v548
        %v550 = vcombine.high %v541, %v548
        %v552 = vunpack.c.l.s4 1966171168
        %v553 = vunpack.c.0.s8 %v552
        %v554 = vlaneseq
        %v555 = vshrl.u32 %v554, 7
        %v556 = vsub.s32 %v553, %v555
        %v557 = vrot.slane %v549, %v556
        %v559 = vunpack.c.l.s4 1966171168
        %v560 = vunpack.c.0.s8 %v559
        %v561 = vlaneseq
        %v562 = vshrl.u32 %v561, 7
        %v563 = vsub.s32 %v560, %v562
        %v564 = vrot.slane %v550, %v563
        %v565 = vsel %vm307, %v479, %v525
        %v566 = vsel %vm307, %v486, %v526
        %v567 = vsel %vm307, %v557, 0
        %v569 = vsel %vm307, %v564, 0
        %571 = vmatprep.subr.mxu0 %v566
        %572 = vmatpush1.msra.mxu0 %v565
        %573 = vmatprep.subr.mxu0 %v569
        %574 = vmatpush1.msra.mxu0 %v567
        %575 = vmatprep.subr.mxu0 0.0
        %576 = vmatpush1.msra.mxu0 0.0
        %577 = vmatprep.subr.mxu0 0.0
        %578 = vmatpush1.msra.mxu0 0.0
        %579 = vmatprep.subr.mxu0 0.0
        %580 = vmatpush1.msra.mxu0 0.0
        %581 = vmatprep.subr.mxu0 0.0
        %582 = vmatpush1.msra.mxu0 0.0
        %583 = vmatprep.subr.mxu0 0.0
        %584 = vmatpush1.msra.mxu0 0.0
        %585 = vmatprep.subr.mxu0 0.0
        %586 = vmatpush1.msra.mxu0 0.0
        %587 = vmatprep.subr.mxu0 0.0
        %588 = vmatpush1.msra.mxu0 0.0
        %589 = vmatprep.subr.mxu0 0.0
        %590 = vmatpush1.msra.mxu0 0.0
        %591 = vmatprep.subr.mxu0 0.0
        %592 = vmatpush1.msra.mxu0 0.0
        %593 = vmatprep.subr.mxu0 0.0
        %594 = vmatpush1.msra.mxu0 0.0
        %595 = vmatprep.subr.mxu0 0.0
        %596 = vmatpush1.msra.mxu0 0.0
        %597 = vmatprep.subr.mxu0 0.0
        %598 = vmatpush1.msra.mxu0 0.0
        %599 = vmatprep.subr.mxu0 0.0
        %600 = vmatpush1.msra.mxu0 0.0
        %601 = vmatprep.subr.mxu0 0.0
        %602 = vmatpush1.msra.mxu0 0.0
        %603 = vmatprep.subr.mxu0 0.0
        %604 = vmatpush1.msra.mxu0 0.0
        %605 = vmatprep.subr.mxu0 0.0
        %606 = vmatpush1.msra.mxu0 0.0
        %607 = vmatprep.subr.mxu0 0.0
        %608 = vmatpush1.msra.mxu0 0.0
        %609 = vmatprep.subr.mxu0 0.0
        %610 = vmatpush1.msra.mxu0 0.0
        %611 = vmatprep.subr.mxu0 0.0
        %612 = vmatpush1.msra.mxu0 0.0
        %613 = vmatprep.subr.mxu0 0.0
        %614 = vmatpush1.msra.mxu0 0.0
        %615 = vmatprep.subr.mxu0 0.0
        %616 = vmatpush1.msra.mxu0 0.0
        %617 = vmatprep.subr.mxu0 0.0
        %618 = vmatpush1.msra.mxu0 0.0
        %619 = vmatprep.subr.mxu0 0.0
        %620 = vmatpush1.msra.mxu0 0.0
        %621 = vmatprep.subr.mxu0 0.0
        %622 = vmatpush1.msra.mxu0 0.0
        %623 = vmatprep.subr.mxu0 0.0
        %624 = vmatpush1.msra.mxu0 0.0
        %625 = vmatprep.subr.mxu0 0.0
        %626 = vmatpush1.msra.mxu0 0.0
        %627 = vmatprep.subr.mxu0 0.0
        %628 = vmatpush1.msra.mxu0 0.0
        %629 = vmatprep.subr.mxu0 0.0
        %630 = vmatpush1.msra.mxu0 0.0
        %631 = vmatprep.subr.mxu0 0.0
        %632 = vmatpush1.msra.mxu0 0.0
        %633 = vmatprep.subr.mxu0 0.0
        %634 = vmatpush1.msra.mxu0 0.0
        %635 = vmatprep.mubr.f32.mxu0 0.0
        %636 = vmatmul.mubr.f32.gmra.mrb[0].mxu0 %v312
        %v637 = vpop.f32.mrb[0].mxu0
        %v638 = vadd.f32 %v214, %v637
        %v639 = vpop.f32.mrb[0].mxu0
        %v640 = vadd.f32 %v214, %v639
        %641 = vdwg.mxu0
        %v644 = vcombine.low %v638, %v640
        %v646 = vunpack.c.l.s4 1966171168
        %v647 = vunpack.c.0.s8 %v646
        %v648 = vlaneseq
        %v649 = vshrl.u32 %v648, 7
        %v650 = vsub.s32 %v647, %v649
        %v651 = vrot.slane %v644, %v650
        %v652 = vcombine.high %v651, %v651
        %v654 = vunpack.c.l.s4 1966171168
        %v655 = vunpack.c.0.s8 %v654
        %v656 = vlaneseq
        %v657 = vshrl.u32 %v656, 7
        %v658 = vsub.s32 %v655, %v657
        %v659 = vrot.slane %v651, %v658
        %v661 = vunpack.c.l.s4 1966171168
        %v662 = vunpack.c.0.s8 %v661
        %v663 = vlaneseq
        %v664 = vshrl.u32 %v663, 7
        %v665 = vsub.s32 %v662, %v664
        %v666 = vrot.slane %v652, %v665
        %v667 = vcombine.high %v659, %v659
        %v668 = vcombine.high %v666, %v666
        %s673 = scalar_lea.vmem %s206, 1 [#allocation5]
        %674 = vst.msk [vmem:[%s673] ss:$4 sm:$0x3] %vm423, %v659
        %s675 = scalar_lea.vmem %s206, 9 [#allocation5]
        %676 = vst.msk [vmem:[%s675] ss:$4 sm:$0x3] %vm423, %v666
        %s677 = scalar_lea.vmem %s206, 17 [#allocation5]
        %678 = vst.msk [vmem:[%s677] ss:$4 sm:$0x3] %vm423, %v667
        %s679 = scalar_lea.vmem %s206, 25 [#allocation5]
        %680 = vst.msk [vmem:[%s679] ss:$4 sm:$0x3] %vm423, %v668
        %v681 = vld [vmem:[%s443] ss:$8 sm:$0x3]
        %v682 = vld [vmem:[%s445] ss:$8 sm:$0x3]
        %v683 = vld [vmem:[%s447] ss:$8 sm:$0x3]
        %v684 = vld [vmem:[%s449] ss:$8 sm:$0x3]
        %s685 = scalar_lea.vmem %s184, 4 [#allocation2]
        %v686 = vld [vmem:[%s685] ss:$8 sm:$0x3]
        %s687 = scalar_lea.vmem %s184, 20 [#allocation2]
        %v688 = vld [vmem:[%s687] ss:$8 sm:$0x3]
        %s689 = scalar_lea.vmem %s184, 36 [#allocation2]
        %v690 = vld [vmem:[%s689] ss:$8 sm:$0x3]
        %s691 = scalar_lea.vmem %s184, 52 [#allocation2]
        %v692 = vld [vmem:[%s691] ss:$8 sm:$0x3]
        %s693 = scalar_lea.vmem %s184, 5 [#allocation2]
        %v694 = vld [vmem:[%s693] ss:$8 sm:$0x3]
        %s695 = scalar_lea.vmem %s184, 21 [#allocation2]
        %v696 = vld [vmem:[%s695] ss:$8 sm:$0x3]
        %s697 = scalar_lea.vmem %s184, 37 [#allocation2]
        %v698 = vld [vmem:[%s697] ss:$8 sm:$0x3]
        %s699 = scalar_lea.vmem %s184, 53 [#allocation2]
        %v700 = vld [vmem:[%s699] ss:$8 sm:$0x3]
        %v705 = vcombine.low %v681, %v682
        %v706 = vcombine.low %v683, %v684
        %v708 = vunpack.c.l.s4 1966171168
        %v709 = vunpack.c.0.s8 %v708
        %v710 = vlaneseq
        %v711 = vshrl.u32 %v710, 7
        %v712 = vsub.s32 %v709, %v711
        %v713 = vrot.slane %v705, %v712
        %v715 = vunpack.c.l.s4 1966171168
        %v716 = vunpack.c.0.s8 %v715
        %v717 = vlaneseq
        %v718 = vshrl.u32 %v717, 7
        %v719 = vsub.s32 %v716, %v718
        %v720 = vrot.slane %v706, %v719
        %v721 = vcombine.low %v713, %v720
        %v722 = vcombine.high %v713, %v720
        %v724 = vunpack.c.l.s4 1966171168
        %v725 = vunpack.c.0.s8 %v724
        %v726 = vlaneseq
        %v727 = vshrl.u32 %v726, 7
        %v728 = vsub.s32 %v725, %v727
        %v729 = vrot.slane %v721, %v728
        %v731 = vunpack.c.l.s4 1966171168
        %v732 = vunpack.c.0.s8 %v731
        %v733 = vlaneseq
        %v734 = vshrl.u32 %v733, 7
        %v735 = vsub.s32 %v732, %v734
        %v736 = vrot.slane %v722, %v735
        %v743 = vcombine.low %v686, %v688
        %v744 = vcombine.low %v690, %v692
        %v746 = vunpack.c.l.s4 1966171168
        %v747 = vunpack.c.0.s8 %v746
        %v748 = vlaneseq
        %v749 = vshrl.u32 %v748, 7
        %v750 = vsub.s32 %v747, %v749
        %v751 = vrot.slane %v743, %v750
        %v753 = vunpack.c.l.s4 1966171168
        %v754 = vunpack.c.0.s8 %v753
        %v755 = vlaneseq
        %v756 = vshrl.u32 %v755, 7
        %v757 = vsub.s32 %v754, %v756
        %v758 = vrot.slane %v744, %v757
        %v759 = vcombine.low %v751, %v758
        %v760 = vcombine.high %v751, %v758
        %v762 = vunpack.c.l.s4 1966171168
        %v763 = vunpack.c.0.s8 %v762
        %v764 = vlaneseq
        %v765 = vshrl.u32 %v764, 7
        %v766 = vsub.s32 %v763, %v765
        %v767 = vrot.slane %v759, %v766
        %v769 = vunpack.c.l.s4 1966171168
        %v770 = vunpack.c.0.s8 %v769
        %v771 = vlaneseq
        %v772 = vshrl.u32 %v771, 7
        %v773 = vsub.s32 %v770, %v772
        %v774 = vrot.slane %v760, %v773
        %v775 = vcombine.low %v767, %v767
        %v776 = vcombine.low %v774, %v774
        %v783 = vcombine.low %v694, %v696
        %v784 = vcombine.low %v698, %v700
        %v786 = vunpack.c.l.s4 1966171168
        %v787 = vunpack.c.0.s8 %v786
        %v788 = vlaneseq
        %v789 = vshrl.u32 %v788, 7
        %v790 = vsub.s32 %v787, %v789
        %v791 = vrot.slane %v783, %v790
        %v793 = vunpack.c.l.s4 1966171168
        %v794 = vunpack.c.0.s8 %v793
        %v795 = vlaneseq
        %v796 = vshrl.u32 %v795, 7
        %v797 = vsub.s32 %v794, %v796
        %v798 = vrot.slane %v784, %v797
        %v799 = vcombine.low %v791, %v798
        %v800 = vcombine.high %v791, %v798
        %v802 = vunpack.c.l.s4 1966171168
        %v803 = vunpack.c.0.s8 %v802
        %v804 = vlaneseq
        %v805 = vshrl.u32 %v804, 7
        %v806 = vsub.s32 %v803, %v805
        %v807 = vrot.slane %v799, %v806
        %v809 = vunpack.c.l.s4 1966171168
        %v810 = vunpack.c.0.s8 %v809
        %v811 = vlaneseq
        %v812 = vshrl.u32 %v811, 7
        %v813 = vsub.s32 %v810, %v812
        %v814 = vrot.slane %v800, %v813
        %v815 = vsel %vm307, %v729, %v775
        %v816 = vsel %vm307, %v736, %v776
        %v817 = vsel %vm307, %v807, 0
        %v819 = vsel %vm307, %v814, 0
        %821 = vmatprep.subr.mxu0 %v816
        %822 = vmatpush1.msra.mxu0 %v815
        %823 = vmatprep.subr.mxu0 %v819
        %824 = vmatpush1.msra.mxu0 %v817
        %825 = vmatprep.subr.mxu0 0.0
        %826 = vmatpush1.msra.mxu0 0.0
        %827 = vmatprep.subr.mxu0 0.0
        %828 = vmatpush1.msra.mxu0 0.0
        %829 = vmatprep.subr.mxu0 0.0
        %830 = vmatpush1.msra.mxu0 0.0
        %831 = vmatprep.subr.mxu0 0.0
        %832 = vmatpush1.msra.mxu0 0.0
        %833 = vmatprep.subr.mxu0 0.0
        %834 = vmatpush1.msra.mxu0 0.0
        %835 = vmatprep.subr.mxu0 0.0
        %836 = vmatpush1.msra.mxu0 0.0
        %837 = vmatprep.subr.mxu0 0.0
        %838 = vmatpush1.msra.mxu0 0.0
        %839 = vmatprep.subr.mxu0 0.0
        %840 = vmatpush1.msra.mxu0 0.0
        %841 = vmatprep.subr.mxu0 0.0
        %842 = vmatpush1.msra.mxu0 0.0
        %843 = vmatprep.subr.mxu0 0.0
        %844 = vmatpush1.msra.mxu0 0.0
        %845 = vmatprep.subr.mxu0 0.0
        %846 = vmatpush1.msra.mxu0 0.0
        %847 = vmatprep.subr.mxu0 0.0
        %848 = vmatpush1.msra.mxu0 0.0
        %849 = vmatprep.subr.mxu0 0.0
        %850 = vmatpush1.msra.mxu0 0.0
        %851 = vmatprep.subr.mxu0 0.0
        %852 = vmatpush1.msra.mxu0 0.0
        %853 = vmatprep.subr.mxu0 0.0
        %854 = vmatpush1.msra.mxu0 0.0
        %855 = vmatprep.subr.mxu0 0.0
        %856 = vmatpush1.msra.mxu0 0.0
        %857 = vmatprep.subr.mxu0 0.0
        %858 = vmatpush1.msra.mxu0 0.0
        %859 = vmatprep.subr.mxu0 0.0
        %860 = vmatpush1.msra.mxu0 0.0
        %861 = vmatprep.subr.mxu0 0.0
        %862 = vmatpush1.msra.mxu0 0.0
        %863 = vmatprep.subr.mxu0 0.0
        %864 = vmatpush1.msra.mxu0 0.0
        %865 = vmatprep.subr.mxu0 0.0
        %866 = vmatpush1.msra.mxu0 0.0
        %867 = vmatprep.subr.mxu0 0.0
        %868 = vmatpush1.msra.mxu0 0.0
        %869 = vmatprep.subr.mxu0 0.0
        %870 = vmatpush1.msra.mxu0 0.0
        %871 = vmatprep.subr.mxu0 0.0
        %872 = vmatpush1.msra.mxu0 0.0
        %873 = vmatprep.subr.mxu0 0.0
        %874 = vmatpush1.msra.mxu0 0.0
        %875 = vmatprep.subr.mxu0 0.0
        %876 = vmatpush1.msra.mxu0 0.0
        %877 = vmatprep.subr.mxu0 0.0
        %878 = vmatpush1.msra.mxu0 0.0
        %879 = vmatprep.subr.mxu0 0.0
        %880 = vmatpush1.msra.mxu0 0.0
        %881 = vmatprep.subr.mxu0 0.0
        %882 = vmatpush1.msra.mxu0 0.0
        %883 = vmatprep.subr.mxu0 0.0
        %884 = vmatpush1.msra.mxu0 0.0
        %885 = vmatprep.mubr.f32.mxu0 0.0
        %886 = vmatmul.mubr.f32.gmra.mrb[0].mxu0 %v312
        %v887 = vpop.f32.mrb[0].mxu0
        %v888 = vadd.f32 %v214, %v887
        %v889 = vpop.f32.mrb[0].mxu0
        %v890 = vadd.f32 %v214, %v889
        %891 = vdwg.mxu0
        %v894 = vcombine.low %v888, %v890
        %v896 = vunpack.c.l.s4 1966171168
        %v897 = vunpack.c.0.s8 %v896
        %v898 = vlaneseq
        %v899 = vshrl.u32 %v898, 7
        %v900 = vsub.s32 %v897, %v899
        %v901 = vrot.slane %v894, %v900
        %v902 = vcombine.high %v901, %v901
        %v904 = vunpack.c.l.s4 1966171168
        %v905 = vunpack.c.0.s8 %v904
        %v906 = vlaneseq
        %v907 = vshrl.u32 %v906, 7
        %v908 = vsub.s32 %v905, %v907
        %v909 = vrot.slane %v901, %v908
        %v911 = vunpack.c.l.s4 1966171168
        %v912 = vunpack.c.0.s8 %v911
        %v913 = vlaneseq
        %v914 = vshrl.u32 %v913, 7
        %v915 = vsub.s32 %v912, %v914
        %v916 = vrot.slane %v902, %v915
        %v917 = vcombine.high %v909, %v909
        %v918 = vcombine.high %v916, %v916
        %s923 = scalar_lea.vmem %s206, 2 [#allocation5]
        %924 = vst.msk [vmem:[%s923] ss:$4 sm:$0x3] %vm423, %v909
        %s925 = scalar_lea.vmem %s206, 10 [#allocation5]
        %926 = vst.msk [vmem:[%s925] ss:$4 sm:$0x3] %vm423, %v916
        %s927 = scalar_lea.vmem %s206, 18 [#allocation5]
        %928 = vst.msk [vmem:[%s927] ss:$4 sm:$0x3] %vm423, %v917
        %s929 = scalar_lea.vmem %s206, 26 [#allocation5]
        %930 = vst.msk [vmem:[%s929] ss:$4 sm:$0x3] %vm423, %v918
        %v931 = vld [vmem:[%s693] ss:$8 sm:$0x3]
        %v932 = vld [vmem:[%s695] ss:$8 sm:$0x3]
        %v933 = vld [vmem:[%s697] ss:$8 sm:$0x3]
        %v934 = vld [vmem:[%s699] ss:$8 sm:$0x3]
        %s935 = scalar_lea.vmem %s184, 6 [#allocation2]
        %v936 = vld [vmem:[%s935] ss:$8 sm:$0x3]
        %s937 = scalar_lea.vmem %s184, 22 [#allocation2]
        %v938 = vld [vmem:[%s937] ss:$8 sm:$0x3]
        %s939 = scalar_lea.vmem %s184, 38 [#allocation2]
        %v940 = vld [vmem:[%s939] ss:$8 sm:$0x3]
        %s941 = scalar_lea.vmem %s184, 54 [#allocation2]
        %v942 = vld [vmem:[%s941] ss:$8 sm:$0x3]
        %s943 = scalar_lea.vmem %s184, 7 [#allocation2]
        %v944 = vld [vmem:[%s943] ss:$8 sm:$0x3]
        %s945 = scalar_lea.vmem %s184, 23 [#allocation2]
        %v946 = vld [vmem:[%s945] ss:$8 sm:$0x3]
        %s947 = scalar_lea.vmem %s184, 39 [#allocation2]
        %v948 = vld [vmem:[%s947] ss:$8 sm:$0x3]
        %s949 = scalar_lea.vmem %s184, 55 [#allocation2]
        %v950 = vld [vmem:[%s949] ss:$8 sm:$0x3]
        %v955 = vcombine.low %v931, %v932
        %v956 = vcombine.low %v933, %v934
        %v958 = vunpack.c.l.s4 1966171168
        %v959 = vunpack.c.0.s8 %v958
        %v960 = vlaneseq
        %v961 = vshrl.u32 %v960, 7
        %v962 = vsub.s32 %v959, %v961
        %v963 = vrot.slane %v955, %v962
        %v965 = vunpack.c.l.s4 1966171168
        %v966 = vunpack.c.0.s8 %v965
        %v967 = vlaneseq
        %v968 = vshrl.u32 %v967, 7
        %v969 = vsub.s32 %v966, %v968
        %v970 = vrot.slane %v956, %v969
        %v971 = vcombine.low %v963, %v970
        %v972 = vcombine.high %v963, %v970
        %v974 = vunpack.c.l.s4 1966171168
        %v975 = vunpack.c.0.s8 %v974
        %v976 = vlaneseq
        %v977 = vshrl.u32 %v976, 7
        %v978 = vsub.s32 %v975, %v977
        %v979 = vrot.slane %v971, %v978
        %v981 = vunpack.c.l.s4 1966171168
        %v982 = vunpack.c.0.s8 %v981
        %v983 = vlaneseq
        %v984 = vshrl.u32 %v983, 7
        %v985 = vsub.s32 %v982, %v984
        %v986 = vrot.slane %v972, %v985
        %v993 = vcombine.low %v936, %v938
        %v994 = vcombine.low %v940, %v942
        %v996 = vunpack.c.l.s4 1966171168
        %v997 = vunpack.c.0.s8 %v996
        %v998 = vlaneseq
        %v999 = vshrl.u32 %v998, 7
        %v1000 = vsub.s32 %v997, %v999
        %v1001 = vrot.slane %v993, %v1000
        %v1003 = vunpack.c.l.s4 1966171168
        %v1004 = vunpack.c.0.s8 %v1003
        %v1005 = vlaneseq
        %v1006 = vshrl.u32 %v1005, 7
        %v1007 = vsub.s32 %v1004, %v1006
        %v1008 = vrot.slane %v994, %v1007
        %v1009 = vcombine.low %v1001, %v1008
        %v1010 = vcombine.high %v1001, %v1008
        %v1012 = vunpack.c.l.s4 1966171168
        %v1013 = vunpack.c.0.s8 %v1012
        %v1014 = vlaneseq
        %v1015 = vshrl.u32 %v1014, 7
        %v1016 = vsub.s32 %v1013, %v1015
        %v1017 = vrot.slane %v1009, %v1016
        %v1019 = vunpack.c.l.s4 1966171168
        %v1020 = vunpack.c.0.s8 %v1019
        %v1021 = vlaneseq
        %v1022 = vshrl.u32 %v1021, 7
        %v1023 = vsub.s32 %v1020, %v1022
        %v1024 = vrot.slane %v1010, %v1023
        %v1025 = vcombine.low %v1017, %v1017
        %v1026 = vcombine.low %v1024, %v1024
        %v1033 = vcombine.low %v944, %v946
        %v1034 = vcombine.low %v948, %v950
        %v1036 = vunpack.c.l.s4 1966171168
        %v1037 = vunpack.c.0.s8 %v1036
        %v1038 = vlaneseq
        %v1039 = vshrl.u32 %v1038, 7
        %v1040 = vsub.s32 %v1037, %v1039
        %v1041 = vrot.slane %v1033, %v1040
        %v1043 = vunpack.c.l.s4 1966171168
        %v1044 = vunpack.c.0.s8 %v1043
        %v1045 = vlaneseq
        %v1046 = vshrl.u32 %v1045, 7
        %v1047 = vsub.s32 %v1044, %v1046
        %v1048 = vrot.slane %v1034, %v1047
        %v1049 = vcombine.low %v1041, %v1048
        %v1050 = vcombine.high %v1041, %v1048
        %v1052 = vunpack.c.l.s4 1966171168
        %v1053 = vunpack.c.0.s8 %v1052
        %v1054 = vlaneseq
        %v1055 = vshrl.u32 %v1054, 7
        %v1056 = vsub.s32 %v1053, %v1055
        %v1057 = vrot.slane %v1049, %v1056
        %v1059 = vunpack.c.l.s4 1966171168
        %v1060 = vunpack.c.0.s8 %v1059
        %v1061 = vlaneseq
        %v1062 = vshrl.u32 %v1061, 7
        %v1063 = vsub.s32 %v1060, %v1062
        %v1064 = vrot.slane %v1050, %v1063
        %v1065 = vsel %vm307, %v979, %v1025
        %v1066 = vsel %vm307, %v986, %v1026
        %v1067 = vsel %vm307, %v1057, 0
        %v1069 = vsel %vm307, %v1064, 0
        %1071 = vmatprep.subr.mxu0 %v1066
        %1072 = vmatpush1.msra.mxu0 %v1065
        %1073 = vmatprep.subr.mxu0 %v1069
        %1074 = vmatpush1.msra.mxu0 %v1067
        %1075 = vmatprep.subr.mxu0 0.0
        %1076 = vmatpush1.msra.mxu0 0.0
        %1077 = vmatprep.subr.mxu0 0.0
        %1078 = vmatpush1.msra.mxu0 0.0
        %1079 = vmatprep.subr.mxu0 0.0
        %1080 = vmatpush1.msra.mxu0 0.0
        %1081 = vmatprep.subr.mxu0 0.0
        %1082 = vmatpush1.msra.mxu0 0.0
        %1083 = vmatprep.subr.mxu0 0.0
        %1084 = vmatpush1.msra.mxu0 0.0
        %1085 = vmatprep.subr.mxu0 0.0
        %1086 = vmatpush1.msra.mxu0 0.0
        %1087 = vmatprep.subr.mxu0 0.0
        %1088 = vmatpush1.msra.mxu0 0.0
        %1089 = vmatprep.subr.mxu0 0.0
        %1090 = vmatpush1.msra.mxu0 0.0
        %1091 = vmatprep.subr.mxu0 0.0
        %1092 = vmatpush1.msra.mxu0 0.0
        %1093 = vmatprep.subr.mxu0 0.0
        %1094 = vmatpush1.msra.mxu0 0.0
        %1095 = vmatprep.subr.mxu0 0.0
        %1096 = vmatpush1.msra.mxu0 0.0
        %1097 = vmatprep.subr.mxu0 0.0
        %1098 = vmatpush1.msra.mxu0 0.0
        %1099 = vmatprep.subr.mxu0 0.0
        %1100 = vmatpush1.msra.mxu0 0.0
        %1101 = vmatprep.subr.mxu0 0.0
        %1102 = vmatpush1.msra.mxu0 0.0
        %1103 = vmatprep.subr.mxu0 0.0
        %1104 = vmatpush1.msra.mxu0 0.0
        %1105 = vmatprep.subr.mxu0 0.0
        %1106 = vmatpush1.msra.mxu0 0.0
        %1107 = vmatprep.subr.mxu0 0.0
        %1108 = vmatpush1.msra.mxu0 0.0
        %1109 = vmatprep.subr.mxu0 0.0
        %1110 = vmatpush1.msra.mxu0 0.0
        %1111 = vmatprep.subr.mxu0 0.0
        %1112 = vmatpush1.msra.mxu0 0.0
        %1113 = vmatprep.subr.mxu0 0.0
        %1114 = vmatpush1.msra.mxu0 0.0
        %1115 = vmatprep.subr.mxu0 0.0
        %1116 = vmatpush1.msra.mxu0 0.0
        %1117 = vmatprep.subr.mxu0 0.0
        %1118 = vmatpush1.msra.mxu0 0.0
        %1119 = vmatprep.subr.mxu0 0.0
        %1120 = vmatpush1.msra.mxu0 0.0
        %1121 = vmatprep.subr.mxu0 0.0
        %1122 = vmatpush1.msra.mxu0 0.0
        %1123 = vmatprep.subr.mxu0 0.0
        %1124 = vmatpush1.msra.mxu0 0.0
        %1125 = vmatprep.subr.mxu0 0.0
        %1126 = vmatpush1.msra.mxu0 0.0
        %1127 = vmatprep.subr.mxu0 0.0
        %1128 = vmatpush1.msra.mxu0 0.0
        %1129 = vmatprep.subr.mxu0 0.0
        %1130 = vmatpush1.msra.mxu0 0.0
        %1131 = vmatprep.subr.mxu0 0.0
        %1132 = vmatpush1.msra.mxu0 0.0
        %1133 = vmatprep.subr.mxu0 0.0
        %1134 = vmatpush1.msra.mxu0 0.0
        %1135 = vmatprep.mubr.f32.mxu0 0.0
        %1136 = vmatmul.mubr.f32.gmra.mrb[0].mxu0 %v312
        %v1137 = vpop.f32.mrb[0].mxu0
        %v1138 = vadd.f32 %v214, %v1137
        %v1139 = vpop.f32.mrb[0].mxu0
        %v1140 = vadd.f32 %v214, %v1139
        %1141 = vdwg.mxu0
        %v1144 = vcombine.low %v1138, %v1140
        %v1146 = vunpack.c.l.s4 1966171168
        %v1147 = vunpack.c.0.s8 %v1146
        %v1148 = vlaneseq
        %v1149 = vshrl.u32 %v1148, 7
        %v1150 = vsub.s32 %v1147, %v1149
        %v1151 = vrot.slane %v1144, %v1150
        %v1152 = vcombine.high %v1151, %v1151
        %v1154 = vunpack.c.l.s4 1966171168
        %v1155 = vunpack.c.0.s8 %v1154
        %v1156 = vlaneseq
        %v1157 = vshrl.u32 %v1156, 7
        %v1158 = vsub.s32 %v1155, %v1157
        %v1159 = vrot.slane %v1151, %v1158
        %v1161 = vunpack.c.l.s4 1966171168
        %v1162 = vunpack.c.0.s8 %v1161
        %v1163 = vlaneseq
        %v1164 = vshrl.u32 %v1163, 7
        %v1165 = vsub.s32 %v1162, %v1164
        %v1166 = vrot.slane %v1152, %v1165
        %v1167 = vcombine.high %v1159, %v1159
        %v1168 = vcombine.high %v1166, %v1166
        %s1173 = scalar_lea.vmem %s206, 3 [#allocation5]
        %1174 = vst.msk [vmem:[%s1173] ss:$4 sm:$0x3] %vm423, %v1159
        %s1175 = scalar_lea.vmem %s206, 11 [#allocation5]
        %1176 = vst.msk [vmem:[%s1175] ss:$4 sm:$0x3] %vm423, %v1166
        %s1177 = scalar_lea.vmem %s206, 19 [#allocation5]
        %1178 = vst.msk [vmem:[%s1177] ss:$4 sm:$0x3] %vm423, %v1167
        %s1179 = scalar_lea.vmem %s206, 27 [#allocation5]
        %1180 = vst.msk [vmem:[%s1179] ss:$4 sm:$0x3] %vm423, %v1168
        %s1181 = sand.u32 %s112, 1
        %s1182 = scalar_lea.sflag [#allocation4], %s1181
        %s1183 = sand.u32 %s112, 1
        %s1184 = smul.addr %s1183, 32
        %s1185 = scalar_lea.vmem [#allocation5], %s1184
        // Predicated region
        $region37: #{tpu_custom_call.1} parent=31 // pred_check
          %p1186 = pneg %p122
        $region38: #{tpu_custom_call.1} parent=31 // pred_check_branch
          %1188 = sbr.rel (%p1186) target = $region40
        $region39: #{tpu_custom_call.1} parent=31 // pred_region
          %s1189 = smul.u32 2, %s25
          %s1191 = ssub.s32 512, 512
          %1192 = vsyncadd %s1182, %s1191
          %s1193 = smul.addr %s24, 8
          %s1194 = sadd.s32 %s1189, %s1193
          %s1195 = smul.addr %s1194, 64
          %s1196 = scalar_lea.hbm %s3, %s1195
          %s1197 = sshll.u32 %s1185, 4
          %s1198 = int_to_ptr.vmem [resolvable:$true] %s1197
          %1203 = dma.vmem_to_hbm [thread:$0]  %s1198, 512, %s1196, %s1182, 128, 128, 8
        $region40: #{tpu_custom_call.1} parent=31 // pred_fallthru
          _
      $region32: #{tpu_custom_call.1} parent=5 // pred_fallthru
        _
      %p1204 = scmp.le.s32.totalorder 2, %s15
      // Predicated region
      $region41: #{tpu_custom_call.1} parent=5 // pred_check
        %p1205 = pneg %p1204
      $region42: #{tpu_custom_call.1} parent=5 // pred_check_branch
        %1207 = sbr.rel (%p1205) target = $region44
      $region43: #{tpu_custom_call.1} parent=5 // pred_region
        %s1208 = ssub.s32 %s15, 2
        // Predicated region
        $region45: #{tpu_custom_call.1} parent=43 // pred_check
          %p1209 = pneg %p128
        $region46: #{tpu_custom_call.1} parent=43 // pred_check_branch
          %1211 = sbr.rel (%p1209) target = $region48
        $region47: #{tpu_custom_call.1} parent=43 // pred_region
          %s1212 = sand.u32 %s113, 1
          %s1213 = scalar_lea.sflag [#allocation4], %s1212
          %s1214 = sand.u32 %s113, 1
          %s1215 = smul.addr %s1214, 32
          %s1216 = scalar_lea.vmem [#allocation5], %s1215
          %1217 = dma.done %s1213, 512
        $region48: #{tpu_custom_call.1} parent=43 // pred_fallthru
          _
      $region44: #{tpu_custom_call.1} parent=5 // pred_fallthru
        _
    $region6: #{tpu_custom_call.1} parent=1 // loop_footer
      %s19 = sadd.s32 1, %s15
    $region7: #{tpu_custom_call.1} parent=1 // loop_footer_branch
      %14 = sbr.rel target = $region3
    $region8: #{tpu_custom_call.1} parent=1 // loop_exit
      _
    %1218 = vsyncpa [#allocation3], 1
    %s1219 = scalar_lea.sflag [#allocation3], 1
    %1220 = vsyncpa %s1219, 1
    %1221 = vsyncpa [#allocation4], 1
    %s1222 = scalar_lea.sflag [#allocation4], 1
    %1223 = vsyncpa %s1222, 1

</llo_original>
